<compile_context>
chip_gen: v7x
topology: tpu7x:2x2x1
jax: 0.10.0
libtpu: 0.0.40
codegen_flags: <defaults>
</compile_context>

<pallas_src>
import jax
import jax.numpy as jnp
from jax.experimental import pallas as pl
from jax.experimental.pallas import tpu as pltpu

EMBSIZE = 20
NEG_SLOPE = 0.2
LANE = 128


def _cdiv(a, b):
    return -(-a // b)


def _round_up(n, m):
    return ((n + m - 1) // m) * m


def _pad_to(a, shape):
    pads = [(0, t - s) for s, t in zip(a.shape, shape)]
    return jnp.pad(a, pads)


def _leaky_relu(x):
    # max(x, a*x) == leaky_relu for 0 < a < 1 : mul + max, no select.
    return jnp.maximum(x, NEG_SLOPE * x)


def _default_epilogue_dtype():
    """bf16 elementwise epilogue only where the VPU/EUP support it (v6e/v7x)."""
    try:
        kind = jax.devices()[0].device_kind.lower()
    except Exception:
        return jnp.float32
    if ("v6" in kind) or ("v7" in kind) or ("7x" in kind):
        return jnp.bfloat16
    return jnp.float32


def mlp_disc_kernel(xin_ref,
                    w1_ref, b1_ref,
                    w2_ref, b2_ref,
                    w3_ref, b3_ref,
                    w4t_ref, b4t_ref,
                    o_ref):
    x = xin_ref[...]                                   # (TB, Dinp) bf16 (x ++ emb packed)

    # fc1 (single fused dot): f32 MXU accumulation, epilogue in b*_ref.dtype.
    a = jnp.dot(x, w1_ref[...], preferred_element_type=jnp.float32)
    h = _leaky_relu(a.astype(b1_ref.dtype) + b1_ref[...]).astype(jnp.bfloat16)

    a = jnp.dot(h, w2_ref[...], preferred_element_type=jnp.float32)
    h = _leaky_relu(a.astype(b2_ref.dtype) + b2_ref[...]).astype(jnp.bfloat16)

    a = jnp.dot(h, w3_ref[...], preferred_element_type=jnp.float32)
    h = _leaky_relu(a.astype(b3_ref.dtype) + b3_ref[...]).astype(jnp.bfloat16)

    # fc4 directly in (out_dim, TB) orientation (lane-dense): contract the last
    # dims of w4t (out_dim, H3p) and h (TB, H3p)  ->  (out_dim, TB), f32.
    zt = jax.lax.dot_general(w4t_ref[...], h,
                             dimension_numbers=(((1,), (1,)), ((), ())),
                             preferred_element_type=jnp.float32)
    zt = zt + b4t_ref[...]                             # (out_dim, 1) lane-broadcast
    # sigmoid(z) = 1 / (1 + exp(-z)); exp + approx reciprocal live on the EUP,
    # now on dense vregs (TB along lanes), not 1-of-128-lane ones.
    o_ref[...] = pl.reciprocal(1.0 + jnp.exp(-zt), approx=True).astype(o_ref.dtype)


def prepare_kernel_params(params, input_dim, epilogue_dtype=None):
    """Pack/pad the PyTorch-layout params for the kernel (done once).

    * w1 is a single padded (Dinp, H1p) matrix (Dinp = round_up(input_dim+EMBSIZE, 16))
      so fc1 is one dot against the packed [x | emb | 0] operand.
    * Hidden dims zero-padded to 128 lanes (exact no-op: zero cols x zero rows).
    * w4/b4 stored transposed so the kernel emits a lane-dense (out_dim, TB) result.
    * Biases b1..b3 in the chip's epilogue dtype; b4 stays f32 for the sigmoid.
    """
    if epilogue_dtype is None:
        epilogue_dtype = _default_epilogue_dtype()
    d_real = input_dim + EMBSIZE
    Dinp = _round_up(d_real, 16)
    H1 = params["w1"].shape[1]
    H2 = params["w2"].shape[1]
    H3 = params["w3"].shape[1]
    OUT = params["w4"].shape[1]
    H1p, H2p, H3p = (_round_up(h, LANE) for h in (H1, H2, H3))
    return {
        "w1":  _pad_to(params["w1"], (Dinp, H1p)).astype(jnp.bfloat16),
        "b1":  _pad_to(params["b1"], (1, H1p)).astype(epilogue_dtype),
        "w2":  _pad_to(params["w2"], (H1p, H2p)).astype(jnp.bfloat16),
        "b2":  _pad_to(params["b2"], (1, H2p)).astype(epilogue_dtype),
        "w3":  _pad_to(params["w3"], (H2p, H3p)).astype(jnp.bfloat16),
        "b3":  _pad_to(params["b3"], (1, H3p)).astype(epilogue_dtype),
        "w4t": _pad_to(params["w4"], (H3p, OUT)).T.astype(jnp.bfloat16),   # (OUT, H3p)
        "b4t": params["b4"].T.astype(jnp.float32),                         # (OUT, 1)
        "emb": params["emb"].astype(jnp.bfloat16),
    }


def mlp_discriminator(x, y, kparams, *, block_b=1024):
    """x: (B, input_dim) float32; y: (B,) int32 labels in [0, 10)."""
    B, input_dim = x.shape
    Dinp = kparams["w1"].shape[0]
    out_dim = kparams["w4t"].shape[0]
    assert input_dim + EMBSIZE <= Dinp, "kparams prepared for a different input_dim"

    # Embedding gather + packing into one operand stays plain-JAX glue.
    emb = kparams["emb"][y]                                     # (B, EMBSIZE) bf16
    packed = jnp.concatenate([x.astype(jnp.bfloat16), emb], axis=1)   # (B, in+20)

    # Balanced batch tiling: minimal tail padding, >=2 grid steps when B allows
    # (so both v7x TensorCores get work), TB a multiple of 16 (bf16 sublanes).
    n_tiles = _cdiv(B, block_b)
    if B >= 32:
        n_tiles = max(n_tiles, 2)
    TB = _round_up(_cdiv(B, n_tiles), 16)
    Bp = n_tiles * TB

    packed = jnp.pad(packed, ((0, Bp - B), (0, Dinp - packed.shape[1])))

    weights = (kparams["w1"], kparams["b1"],
               kparams["w2"], kparams["b2"],
               kparams["w3"], kparams["b3"],
               kparams["w4t"], kparams["b4t"])

    def resident(a):
        # weights/biases: constant index_map -> fetched once, VMEM resident.
        return pl.BlockSpec(a.shape, lambda i: (0, 0))

    flops = 2 * Bp * (Dinp * kparams["w1"].shape[1]
                      + kparams["w2"].shape[0] * kparams["w2"].shape[1]
                      + kparams["w3"].shape[0] * kparams["w3"].shape[1]
                      + kparams["w4t"].shape[1] * out_dim)
    bytes_accessed = (packed.size * 2 + Bp * out_dim * 4
                      + sum(int(w.size) * int(w.dtype.itemsize) for w in weights))

    # TODO(synk): if an xprof trace still shows exposed input DMA at large B,
    # add pipeline_mode=pl.Buffered(3) to the streaming (packed) in_spec only.
    out = pl.pallas_call(
        mlp_disc_kernel,
        out_shape=jax.ShapeDtypeStruct((n_tiles, out_dim, TB), jnp.float32),
        grid=(n_tiles,),
        in_specs=[pl.BlockSpec((TB, Dinp), lambda i: (i, 0))]
                 + [resident(w) for w in weights],
        # Lane-dense output block: (out_dim, TB) per grid step, TB on lanes.
        out_specs=pl.BlockSpec((None, out_dim, TB), lambda i: (i, 0, 0)),
        compiler_params=pltpu.CompilerParams(
            dimension_semantics=("parallel",)),
        cost_estimate=pl.CostEstimate(flops=flops,
                                      transcendentals=Bp * out_dim,
                                      bytes_accessed=bytes_accessed),
    )(packed, *weights)

    # (n_tiles, out_dim, TB) -> (Bp, out_dim) -> (B, out_dim)
    return out.transpose(0, 2, 1).reshape(Bp, out_dim)[:B]


def init_params(key, input_dim, hidden_dim, output_dim):
    d_in = input_dim + EMBSIZE
    dims = [(d_in, hidden_dim),
            (hidden_dim, hidden_dim * 2),
            (hidden_dim * 2, hidden_dim),
            (hidden_dim, output_dim)]
    keys = jax.random.split(key, 9)
    params = {}
    for idx, (di, do) in enumerate(dims, start=1):
        kw, kb = keys[2 * (idx - 1)], keys[2 * (idx - 1) + 1]
        bound = 1.0 / jnp.sqrt(di)
        params[f"w{idx}"] = jax.random.uniform(kw, (di, do), jnp.float32, -bound, bound)
        params[f"b{idx}"] = jax.random.uniform(kb, (1, do), jnp.float32, -bound, bound)
    params["emb"] = jax.random.normal(keys[8], (10, EMBSIZE), jnp.float32)
    return params


def reference_forward(x, y, params):
    emb = params["emb"][y]
    h = jnp.concatenate([x, emb], axis=1)
    h = jax.nn.leaky_relu(h @ params["w1"] + params["b1"], NEG_SLOPE)
    h = jax.nn.leaky_relu(h @ params["w2"] + params["b2"], NEG_SLOPE)
    h = jax.nn.leaky_relu(h @ params["w3"] + params["b3"], NEG_SLOPE)
    return jax.nn.sigmoid(h @ params["w4"] + params["b4"])


if __name__ == "__main__":
    key = jax.random.PRNGKey(0)
    k_params, k_x, k_y, k_x2, k_y2 = jax.random.split(key, 5)

    batch, input_dim, hidden_dim, output_dim = 8, 16, 32, 1

    params = init_params(k_params, input_dim, hidden_dim, output_dim)
    kparams = prepare_kernel_params(params, input_dim)

    # Small case (single tile).
    x = jax.random.normal(k_x, (batch, input_dim), jnp.float32)
    y = jax.random.randint(k_y, (batch,), 0, 10, jnp.int32)
    out = jax.block_until_ready(mlp_discriminator(x, y, kparams))
    ref = reference_forward(x, y, params)
    assert out.shape == (batch, output_dim)
    assert jnp.allclose(out, ref, atol=2e-2), "mismatch vs reference (small batch)"

    # Ragged batch exercising the pipelined batch tiling (grid > 1 + padding).
    x2 = jax.random.normal(k_x2, (50, input_dim), jnp.float32)
    y2 = jax.random.randint(k_y2, (50,), 0, 10, jnp.int32)
    out2 = jax.block_until_ready(mlp_discriminator(x2, y2, kparams, block_b=16))
    ref2 = reference_forward(x2, y2, params)
    assert out2.shape == (50, output_dim)
    assert jnp.allclose(out2, ref2, atol=2e-2), "mismatch vs reference (tiled batch)"

    print("KERNEL_OK")
</pallas_src>

<mosaic_0001>
module attributes {stable_mosaic.version = 11 : i64} {
  func.func @mlp_disc_kernel(%arg0: i32, %arg1: memref<16x48xbf16, #tpu.memory_space<vmem>>, %arg2: memref<48x128xbf16, #tpu.memory_space<vmem>>, %arg3: memref<1x128xf32, #tpu.memory_space<vmem>>, %arg4: memref<128x128xbf16, #tpu.memory_space<vmem>>, %arg5: memref<1x128xf32, #tpu.memory_space<vmem>>, %arg6: memref<128x128xbf16, #tpu.memory_space<vmem>>, %arg7: memref<1x128xf32, #tpu.memory_space<vmem>>, %arg8: memref<1x128xbf16, #tpu.memory_space<vmem>>, %arg9: memref<1x1xf32, #tpu.memory_space<vmem>>, %arg10: memref<1x1x16xf32, #tpu.memory_space<vmem>>) attributes {dimension_semantics = [#tpu.dimension_semantics<parallel>], iteration_bounds = array<i64: 1>, scalar_prefetch = 0 : i64, scratch_operands = 0 : i64, tpu.core_type = #tpu.core_type<tc>, window_params = [{transform_indices = @transform_0, window_bounds = array<i64: 16, 48>}, {pipeline_mode = #tpu.pipeline_mode<synchronous>, transform_indices = @transform_1, window_bounds = array<i64: 48, 128>}, {pipeline_mode = #tpu.pipeline_mode<synchronous>, transform_indices = @transform_2, window_bounds = array<i64: 1, 128>}, {pipeline_mode = #tpu.pipeline_mode<synchronous>, transform_indices = @transform_3, window_bounds = array<i64: 128, 128>}, {pipeline_mode = #tpu.pipeline_mode<synchronous>, transform_indices = @transform_4, window_bounds = array<i64: 1, 128>}, {pipeline_mode = #tpu.pipeline_mode<synchronous>, transform_indices = @transform_5, window_bounds = array<i64: 128, 128>}, {pipeline_mode = #tpu.pipeline_mode<synchronous>, transform_indices = @transform_6, window_bounds = array<i64: 1, 128>}, {pipeline_mode = #tpu.pipeline_mode<synchronous>, transform_indices = @transform_7, window_bounds = array<i64: 1, 128>}, {pipeline_mode = #tpu.pipeline_mode<synchronous>, transform_indices = @transform_8, window_bounds = array<i64: 1, 1>}, {transform_indices = @transform_9, window_bounds = array<i64: 1, 1, 16>}]} {
    %c0 = arith.constant 0 : index
    %c0_0 = arith.constant 0 : index
    %0 = vector.load %arg1[%c0, %c0_0] : memref<16x48xbf16, #tpu.memory_space<vmem>>, vector<16x48xbf16>
    %c0_1 = arith.constant 0 : index
    %c0_2 = arith.constant 0 : index
    %1 = vector.load %arg2[%c0_1, %c0_2] : memref<48x128xbf16, #tpu.memory_space<vmem>>, vector<48x128xbf16>
    %cst = arith.constant dense<0.000000e+00> : vector<16x128xf32>
    %2 = tpu.matmul %0, %1, %cst {dimension_numbers = #tpu.dot_dimension_numbers<[1], [0], [0], [1], [0, 0, 1, 1], [], []>} : vector<16x48xbf16>, vector<48x128xbf16>, vector<16x128xf32> -> vector<16x128xf32>
    %c0_3 = arith.constant 0 : index
    %c0_4 = arith.constant 0 : index
    %3 = vector.load %arg3[%c0_3, %c0_4] : memref<1x128xf32, #tpu.memory_space<vmem>>, vector<1x128xf32>
    %4 = vector.broadcast %3 : vector<1x128xf32> to vector<16x128xf32>
    %5 = arith.addf %2, %4 : vector<16x128xf32>
    %cst_5 = arith.constant 2.000000e-01 : f32
    %6 = vector.broadcast %cst_5 : f32 to vector<16x128xf32>
    %7 = arith.mulf %6, %5 : vector<16x128xf32>
    %8 = arith.maximumf %5, %7 : vector<16x128xf32>
    %9 = arith.truncf %8 : vector<16x128xf32> to vector<16x128xbf16>
    %c0_6 = arith.constant 0 : index
    %c0_7 = arith.constant 0 : index
    %10 = vector.load %arg4[%c0_6, %c0_7] : memref<128x128xbf16, #tpu.memory_space<vmem>>, vector<128x128xbf16>
    %cst_8 = arith.constant dense<0.000000e+00> : vector<16x128xf32>
    %11 = tpu.matmul %9, %10, %cst_8 {dimension_numbers = #tpu.dot_dimension_numbers<[1], [0], [0], [1], [0, 0, 1, 1], [], []>} : vector<16x128xbf16>, vector<128x128xbf16>, vector<16x128xf32> -> vector<16x128xf32>
    %c0_9 = arith.constant 0 : index
    %c0_10 = arith.constant 0 : index
    %12 = vector.load %arg5[%c0_9, %c0_10] : memref<1x128xf32, #tpu.memory_space<vmem>>, vector<1x128xf32>
    %13 = vector.broadcast %12 : vector<1x128xf32> to vector<16x128xf32>
    %14 = arith.addf %11, %13 : vector<16x128xf32>
    %cst_11 = arith.constant 2.000000e-01 : f32
    %15 = vector.broadcast %cst_11 : f32 to vector<16x128xf32>
    %16 = arith.mulf %15, %14 : vector<16x128xf32>
    %17 = arith.maximumf %14, %16 : vector<16x128xf32>
    %18 = arith.truncf %17 : vector<16x128xf32> to vector<16x128xbf16>
    %c0_12 = arith.constant 0 : index
    %c0_13 = arith.constant 0 : index
    %19 = vector.load %arg6[%c0_12, %c0_13] : memref<128x128xbf16, #tpu.memory_space<vmem>>, vector<128x128xbf16>
    %cst_14 = arith.constant dense<0.000000e+00> : vector<16x128xf32>
    %20 = tpu.matmul %18, %19, %cst_14 {dimension_numbers = #tpu.dot_dimension_numbers<[1], [0], [0], [1], [0, 0, 1, 1], [], []>} : vector<16x128xbf16>, vector<128x128xbf16>, vector<16x128xf32> -> vector<16x128xf32>
    %c0_15 = arith.constant 0 : index
    %c0_16 = arith.constant 0 : index
    %21 = vector.load %arg7[%c0_15, %c0_16] : memref<1x128xf32, #tpu.memory_space<vmem>>, vector<1x128xf32>
    %22 = vector.broadcast %21 : vector<1x128xf32> to vector<16x128xf32>
    %23 = arith.addf %20, %22 : vector<16x128xf32>
    %cst_17 = arith.constant 2.000000e-01 : f32
    %24 = vector.broadcast %cst_17 : f32 to vector<16x128xf32>
    %25 = arith.mulf %24, %23 : vector<16x128xf32>
    %26 = arith.maximumf %23, %25 : vector<16x128xf32>
    %27 = arith.truncf %26 : vector<16x128xf32> to vector<16x128xbf16>
    %c0_18 = arith.constant 0 : index
    %c0_19 = arith.constant 0 : index
    %28 = vector.load %arg8[%c0_18, %c0_19] : memref<1x128xbf16, #tpu.memory_space<vmem>>, vector<1x128xbf16>
    %cst_20 = arith.constant dense<0.000000e+00> : vector<1x16xf32>
    %29 = tpu.matmul %28, %27, %cst_20 {dimension_numbers = #tpu.dot_dimension_numbers<[1], [1], [0], [0], [0, 0, 1, 0], [], []>} : vector<1x128xbf16>, vector<16x128xbf16>, vector<1x16xf32> -> vector<1x16xf32>
    %c0_21 = arith.constant 0 : index
    %c0_22 = arith.constant 0 : index
    %30 = vector.load %arg9[%c0_21, %c0_22] : memref<1x1xf32, #tpu.memory_space<vmem>>, vector<1x1xf32>
    %31 = vector.broadcast %30 : vector<1x1xf32> to vector<1x16xf32>
    %32 = arith.addf %29, %31 : vector<1x16xf32>
    %cst_23 = arith.constant 0.000000e+00 : f32
    %33 = vector.broadcast %cst_23 : f32 to vector<1x16xf32>
    %34 = arith.subf %33, %32 : vector<1x16xf32>
    %35 = math.exp %34 : vector<1x16xf32>
    %cst_24 = arith.constant 1.000000e+00 : f32
    %36 = vector.broadcast %cst_24 : f32 to vector<1x16xf32>
    %37 = arith.addf %36, %35 : vector<1x16xf32>
    %38 = tpu.reciprocal %37 {approx = true} : vector<1x16xf32> -> vector<1x16xf32>
    %c0_25 = arith.constant 0 : index
    %c0_26 = arith.constant 0 : index
    %c0_27 = arith.constant 0 : index
    %39 = vector.load %arg10[%c0_25, %c0_26, %c0_27] : memref<1x1x16xf32, #tpu.memory_space<vmem>>, vector<1x1x16xf32>
    %40 = vector.shape_cast %39 : vector<1x1x16xf32> to vector<1x16xf32>
    %41 = vector.shape_cast %38 : vector<1x16xf32> to vector<1x1x16xf32>
    tpu.vector_store %arg10[%c0_25, %c0_26, %c0_27], %41 {strides = array<i32>} : memref<1x1x16xf32, #tpu.memory_space<vmem>>, vector<1x1x16xf32>,
    return
  }
  func.func @transform_0(%arg0: i32) -> (i32, i32) {
    %c0_i32 = arith.constant 0 : i32
    %c0_i32_0 = arith.constant 0 : i32
    return %arg0, %c0_i32 : i32, i32
  }
  func.func @transform_1(%arg0: i32) -> (i32, i32) {
    %c0_i32 = arith.constant 0 : i32
    %c0_i32_0 = arith.constant 0 : i32
    %c0_i32_1 = arith.constant 0 : i32
    return %c0_i32, %c0_i32_0 : i32, i32
  }
  func.func @transform_2(%arg0: i32) -> (i32, i32) {
    %c0_i32 = arith.constant 0 : i32
    %c0_i32_0 = arith.constant 0 : i32
    %c0_i32_1 = arith.constant 0 : i32
    return %c0_i32, %c0_i32_0 : i32, i32
  }
  func.func @transform_3(%arg0: i32) -> (i32, i32) {
    %c0_i32 = arith.constant 0 : i32
    %c0_i32_0 = arith.constant 0 : i32
    %c0_i32_1 = arith.constant 0 : i32
    return %c0_i32, %c0_i32_0 : i32, i32
  }
  func.func @transform_4(%arg0: i32) -> (i32, i32) {
    %c0_i32 = arith.constant 0 : i32
    %c0_i32_0 = arith.constant 0 : i32
    %c0_i32_1 = arith.constant 0 : i32
    return %c0_i32, %c0_i32_0 : i32, i32
  }
  func.func @transform_5(%arg0: i32) -> (i32, i32) {
    %c0_i32 = arith.constant 0 : i32
    %c0_i32_0 = arith.constant 0 : i32
    %c0_i32_1 = arith.constant 0 : i32
    return %c0_i32, %c0_i32_0 : i32, i32
  }
  func.func @transform_6(%arg0: i32) -> (i32, i32) {
    %c0_i32 = arith.constant 0 : i32
    %c0_i32_0 = arith.constant 0 : i32
    %c0_i32_1 = arith.constant 0 : i32
    return %c0_i32, %c0_i32_0 : i32, i32
  }
  func.func @transform_7(%arg0: i32) -> (i32, i32) {
    %c0_i32 = arith.constant 0 : i32
    %c0_i32_0 = arith.constant 0 : i32
    %c0_i32_1 = arith.constant 0 : i32
    return %c0_i32, %c0_i32_0 : i32, i32
  }
  func.func @transform_8(%arg0: i32) -> (i32, i32) {
    %c0_i32 = arith.constant 0 : i32
    %c0_i32_0 = arith.constant 0 : i32
    %c0_i32_1 = arith.constant 0 : i32
    return %c0_i32, %c0_i32_0 : i32, i32
  }
  func.func @transform_9(%arg0: i32) -> (i32, i32, i32) {
    %c0_i32 = arith.constant 0 : i32
    %c0_i32_0 = arith.constant 0 : i32
    %c0_i32_1 = arith.constant 0 : i32
    return %arg0, %c0_i32, %c0_i32_0 : i32, i32, i32
  }
}

</mosaic_0001>

<llo_original>
// kernel: tpu_custom_call.1
$region0: #{tpu_custom_call.1}
  #allocation0 [shape = 'u32[]', space=smem, size = 0x4, offset = 0x4, fixed_abs, tag = 'smem constant byte address 0x4 - core index']
  #allocation1 [shape = 'u32[144,128]{1,0:T(1,128)}', space=vmem, size = 0x12000, scoped, tag = 'internal scratch']
  #allocation2 [shape = 'f32[1,1]{1,0:T(1,128)S(1)}', space=vmem, size = 0x200, scoped, tag = 'scoped memory for tpu_custom_call.1']
  %s0 = inlined_call_operand.hbm [shape: bf16[16,48], index: 0, kind: input, shape index: {}]
  %s1 = inlined_call_operand.hbm [shape: bf16[48,128], index: 1, kind: input, shape index: {}]
  %s2 = inlined_call_operand.vmem [shape: f32[1,128], index: 2, kind: input, shape index: {}]
  %s3 = inlined_call_operand.hbm [shape: bf16[128,128], index: 3, kind: input, shape index: {}]
  %s4 = inlined_call_operand.vmem [shape: f32[1,128], index: 4, kind: input, shape index: {}]
  %s5 = inlined_call_operand.hbm [shape: bf16[128,128], index: 5, kind: input, shape index: {}]
  %s6 = inlined_call_operand.vmem [shape: f32[1,128], index: 6, kind: input, shape index: {}]
  %s7 = inlined_call_operand.vmem [shape: bf16[1,128], index: 7, kind: input, shape index: {}]
  %s8 = inlined_call_operand.<no memory space> [shape: f32[1,1], index: 8, kind: input, shape index: {}]
  %s9 = inlined_call_operand.hbm [shape: f32[1,1,16], index: 9, kind: output, shape index: {}]
  %s10 = sld [smem:[#allocation0]]
  $region62: #{tpu_custom_call.1} parent=0
    _
  %s12 = ssub.s32 1, %s10
  %s13 = scalar_select 0, %s12, %s10
  %v14 = vstv %s8
  %15 = vst [vmem:[#allocation2] sm:$0x1] %v14
  $region1: #{tpu_custom_call.1} parent=0
    #allocation3 [shape = 'u8[4096]{0}', space=vmem, size = 0x1000, scoped, tag = 'input window, operand 0, single buffered']
    #allocation4 [shape = 's32[1]{0}', space=sflag, size = 0x4, scoped, tag = 'scoped memory for tpu_custom_call.1']
    #allocation5 [shape = 's32[1]{0}', space=sflag, size = 0x4, scoped, tag = 'scoped memory for tpu_custom_call.1']
    #allocation6 [shape = 'u8[12288]{0}', space=vmem, size = 0x3000, scoped, tag = 'input window, operand 1, single buffered']
    #allocation7 [shape = 's32[1]{0}', space=sflag, size = 0x4, scoped, tag = 'scoped memory for tpu_custom_call.1']
    #allocation8 [shape = 'u8[32768]{0}', space=vmem, size = 0x8000, scoped, tag = 'input window, operand 3, single buffered']
    #allocation9 [shape = 'u8[32768]{0}', space=vmem, size = 0x8000, scoped, tag = 'input window, operand 5, single buffered']
    #allocation10 [shape = 's32[1]{0}', space=sflag, size = 0x4, scoped, tag = 'scoped memory for tpu_custom_call.1']
    #allocation11 [shape = 'u8[512]{0}', space=vmem, size = 0x400, scoped, tag = 'output window, operand 0, single buffered']
    %16 = vsyncpa [#allocation4], 0
    %17 = vsyncpa [#allocation7], 0
    %18 = vsyncpa [#allocation10], 0
    %19 = vsyncpa [#allocation5], 0
    // Predicated region
    $region2: #{tpu_custom_call.1} parent=1 // pred_check
      _
    $region3: #{tpu_custom_call.1} parent=1 // pred_check_branch
      %21 = sbr.rel (0) target = $region5
    $region4: #{tpu_custom_call.1} parent=1 // pred_region
      %s23 = ssub.s32 128, 128
      %24 = vsyncadd [#allocation4], %s23
      %s25 = sshll.u32 [#allocation3], 4
      %s26 = int_to_ptr.vmem [resolvable:$true] %s25
      %31 = dma.hbm_to_vmem [thread:$0]  %s0, 128, %s26, [#allocation4], 64, 64, 4
    $region5: #{tpu_custom_call.1} parent=1 // pred_fallthru
      _
    // Predicated region
    $region6: #{tpu_custom_call.1} parent=1 // pred_check
      _
    $region7: #{tpu_custom_call.1} parent=1 // pred_check_branch
      %33 = sbr.rel (0) target = $region9
    $region8: #{tpu_custom_call.1} parent=1 // pred_region
      %s35 = ssub.s32 384, 384
      %36 = vsyncadd [#allocation7], %s35
      %s37 = sshll.u32 [#allocation6], 4
      %s38 = int_to_ptr.vmem [resolvable:$true] %s37
      %43 = dma.hbm_to_vmem [thread:$0]  %s1, 384, %s38, [#allocation7], 64, 64, 4
    $region9: #{tpu_custom_call.1} parent=1 // pred_fallthru
      _
    // Predicated region
    $region10: #{tpu_custom_call.1} parent=1 // pred_check
      _
    $region11: #{tpu_custom_call.1} parent=1 // pred_check_branch
      %45 = sbr.rel (0) target = $region13
    $region12: #{tpu_custom_call.1} parent=1 // pred_region
      _
    $region13: #{tpu_custom_call.1} parent=1 // pred_fallthru
      _
    // Predicated region
    $region14: #{tpu_custom_call.1} parent=1 // pred_check
      _
    $region15: #{tpu_custom_call.1} parent=1 // pred_check_branch
      %47 = sbr.rel (0) target = $region17
    $region16: #{tpu_custom_call.1} parent=1 // pred_region
      %s49 = ssub.s32 1024, 1024
      %50 = vsyncadd [#allocation7], %s49
      %s51 = sshll.u32 [#allocation8], 4
      %s52 = int_to_ptr.vmem [resolvable:$true] %s51
      %57 = dma.hbm_to_vmem [thread:$0]  %s3, 1024, %s52, [#allocation7], 64, 64, 4
    $region17: #{tpu_custom_call.1} parent=1 // pred_fallthru
      _
    // Predicated region
    $region18: #{tpu_custom_call.1} parent=1 // pred_check
      _
    $region19: #{tpu_custom_call.1} parent=1 // pred_check_branch
      %59 = sbr.rel (0) target = $region21
    $region20: #{tpu_custom_call.1} parent=1 // pred_region
      _
    $region21: #{tpu_custom_call.1} parent=1 // pred_fallthru
      _
    // Predicated region
    $region22: #{tpu_custom_call.1} parent=1 // pred_check
      _
    $region23: #{tpu_custom_call.1} parent=1 // pred_check_branch
      %61 = sbr.rel (0) target = $region25
    $region24: #{tpu_custom_call.1} parent=1 // pred_region
      %s63 = ssub.s32 1024, 1024
      %64 = vsyncadd [#allocation10], %s63
      %s65 = sshll.u32 [#allocation9], 4
      %s66 = int_to_ptr.vmem [resolvable:$true] %s65
      %71 = dma.hbm_to_vmem [thread:$0]  %s5, 1024, %s66, [#allocation10], 64, 64, 4
    $region25: #{tpu_custom_call.1} parent=1 // pred_fallthru
      _
    // Predicated region
    $region26: #{tpu_custom_call.1} parent=1 // pred_check
      _
    $region27: #{tpu_custom_call.1} parent=1 // pred_check_branch
      %73 = sbr.rel (0) target = $region29
    $region28: #{tpu_custom_call.1} parent=1 // pred_region
      _
    $region29: #{tpu_custom_call.1} parent=1 // pred_fallthru
      _
    // Predicated region
    $region30: #{tpu_custom_call.1} parent=1 // pred_check
      _
    $region31: #{tpu_custom_call.1} parent=1 // pred_check_branch
      %75 = sbr.rel (0) target = $region33
    $region32: #{tpu_custom_call.1} parent=1 // pred_region
      _
    $region33: #{tpu_custom_call.1} parent=1 // pred_fallthru
      _
    // Predicated region
    $region34: #{tpu_custom_call.1} parent=1 // pred_check
      _
    $region35: #{tpu_custom_call.1} parent=1 // pred_check_branch
      %77 = sbr.rel (0) target = $region37
    $region36: #{tpu_custom_call.1} parent=1 // pred_region
      _
    $region37: #{tpu_custom_call.1} parent=1 // pred_fallthru
      _
    // Predicated region
    $region38: #{tpu_custom_call.1} parent=1 // pred_check
      _
    $region39: #{tpu_custom_call.1} parent=1 // pred_check_branch
      %79 = sbr.rel (0) target = $region41
    $region40: #{tpu_custom_call.1} parent=1 // pred_region
      %80 = dma.done [#allocation4], 128
    $region41: #{tpu_custom_call.1} parent=1 // pred_fallthru
      _
    // Predicated region
    $region42: #{tpu_custom_call.1} parent=1 // pred_check
      _
    $region43: #{tpu_custom_call.1} parent=1 // pred_check_branch
      %82 = sbr.rel (0) target = $region45
    $region44: #{tpu_custom_call.1} parent=1 // pred_region
      %83 = dma.done [#allocation7], 384
    $region45: #{tpu_custom_call.1} parent=1 // pred_fallthru
      _
    // Predicated region
    $region46: #{tpu_custom_call.1} parent=1 // pred_check
      _
    $region47: #{tpu_custom_call.1} parent=1 // pred_check_branch
      %85 = sbr.rel (0) target = $region49
    $region48: #{tpu_custom_call.1} parent=1 // pred_region
      %86 = dma.done [#allocation7], 1024
    $region49: #{tpu_custom_call.1} parent=1 // pred_fallthru
      _
    // Predicated region
    $region50: #{tpu_custom_call.1} parent=1 // pred_check
      _
    $region51: #{tpu_custom_call.1} parent=1 // pred_check_branch
      %88 = sbr.rel (0) target = $region53
    $region52: #{tpu_custom_call.1} parent=1 // pred_region
      %89 = dma.done [#allocation10], 1024
    $region53: #{tpu_custom_call.1} parent=1 // pred_fallthru
      _
    %v91 = vld [vmem:[#allocation3] sm:$0xf]
    %v92 = vld [vmem:[#allocation3 + $0x4] sm:$0xf]
    %v93 = vld [vmem:[#allocation6] sm:$0xf]
    %v94 = vld [vmem:[#allocation6 + $0x4] sm:$0xf]
    %v95 = vld [vmem:[#allocation6 + $0x8] sm:$0xf]
    %v96 = vld [vmem:[#allocation6 + $0xc] sm:$0xf]
    %v97 = vld [vmem:[#allocation6 + $0x10] sm:$0xf]
    %v98 = vld [vmem:[#allocation6 + $0x14] sm:$0xf]
    %v99 = vld [vmem:[%s2] sm:$0x1]
    %v101 = vlaneseq
    %v102 = vshrl.u32 %v101, 7
    %v103 = vsub.s32 0, %v102
    %v104 = vrot.slane %v99, %v103
    %v108 = vunpack.c.l.b16 %v91
    %v109 = vunpack.c.l.b16 %v92
    %v110 = vpack.c.b16 %v109, %v108
    %v117 = vunpack.c.l.b16 %v93
    %v118 = vunpack.c.l.b16 %v94
    %v119 = vunpack.c.l.b16 %v95
    %v120 = vunpack.c.l.b16 %v96
    %v121 = vunpack.c.l.b16 %v97
    %v122 = vunpack.c.l.b16 %v98
    %v123 = vpack.c.b16 %v118, %v117
    %v124 = vpack.c.b16 %v120, %v119
    %v125 = vpack.c.b16 %v122, %v121
    %vm129 = vcmask 392192
    %v131 = vsel %vm129, %v110, 0
    %133 = vmatprep.subr.bf16.mxu0 0
    %134 = vmatpush1.bf16.msra.mxu0 %v123
    %135 = vmatprep.subr.bf16.mxu0 0
    %136 = vmatpush1.bf16.msra.mxu0 %v124
    %137 = vmatprep.subr.bf16.mxu0 0
    %138 = vmatpush1.bf16.msra.mxu0 %v125
    %139 = vmatprep.subr.bf16.mxu0 0
    %140 = vmatpush1.bf16.msra.mxu0 0
    %141 = vmatprep.subr.bf16.mxu0 0
    %142 = vmatpush1.bf16.msra.mxu0 0
    %143 = vmatprep.subr.bf16.mxu0 0
    %144 = vmatpush1.bf16.msra.mxu0 0
    %145 = vmatprep.subr.bf16.mxu0 0
    %146 = vmatpush1.bf16.msra.mxu0 0
    %147 = vmatprep.subr.bf16.mxu0 0
    %148 = vmatpush1.bf16.msra.mxu0 0
    %149 = vmatprep.subr.bf16.mxu0 0
    %150 = vmatpush1.bf16.msra.mxu0 0
    %151 = vmatprep.subr.bf16.mxu0 0
    %152 = vmatpush1.bf16.msra.mxu0 0
    %153 = vmatprep.subr.bf16.mxu0 0
    %154 = vmatpush1.bf16.msra.mxu0 0
    %155 = vmatprep.subr.bf16.mxu0 0
    %156 = vmatpush1.bf16.msra.mxu0 0
    %157 = vmatprep.subr.bf16.mxu0 0
    %158 = vmatpush1.bf16.msra.mxu0 0
    %159 = vmatprep.subr.bf16.mxu0 0
    %160 = vmatpush1.bf16.msra.mxu0 0
    %161 = vmatprep.subr.bf16.mxu0 0
    %162 = vmatpush1.bf16.msra.mxu0 0
    %163 = vmatprep.subr.bf16.mxu0 0
    %164 = vmatpush1.bf16.msra.mxu0 0
    %165 = vmatprep.mubr.bf16.mxu0 0
    %166 = vmatmul.mubr.bf16.gmra.mrb[0].mxu0 %v131
    %v167 = vpop.f32.mrb[0].mxu0
    %v168 = vadd.f32 %v104, %v167
    %v169 = vpop.f32.mrb[0].mxu0
    %v170 = vpop.f32.mrb[0].mxu0
    %v171 = vadd.f32 %v104, %v170
    %v172 = vpop.f32.mrb[0].mxu0
    %173 = vdwg.mxu0
    %v174 = vmul.f32 %v168, 0.2
    %v175 = vmul.f32 %v171, 0.2
    %v176 = vmax.f32 %v168, %v174
    %v177 = vmax.f32 %v171, %v175
    %v178 = vpack.c.bf16 %v177, %v176
    %v179 = vld [vmem:[#allocation8] sm:$0xf]
    %v180 = vld [vmem:[#allocation8 + $0x4] sm:$0xf]
    %v181 = vld [vmem:[#allocation8 + $0x8] sm:$0xf]
    %v182 = vld [vmem:[#allocation8 + $0xc] sm:$0xf]
    %v183 = vld [vmem:[#allocation8 + $0x10] sm:$0xf]
    %v184 = vld [vmem:[#allocation8 + $0x14] sm:$0xf]
    %v185 = vld [vmem:[#allocation8 + $0x18] sm:$0xf]
    %v186 = vld [vmem:[#allocation8 + $0x1c] sm:$0xf]
    %v187 = vld [vmem:[#allocation8 + $0x20] sm:$0xf]
    %v188 = vld [vmem:[#allocation8 + $0x24] sm:$0xf]
    %v189 = vld [vmem:[#allocation8 + $0x28] sm:$0xf]
    %v190 = vld [vmem:[#allocation8 + $0x2c] sm:$0xf]
    %v191 = vld [vmem:[#allocation8 + $0x30] sm:$0xf]
    %v192 = vld [vmem:[#allocation8 + $0x34] sm:$0xf]
    %v193 = vld [vmem:[#allocation8 + $0x38] sm:$0xf]
    %v194 = vld [vmem:[#allocation8 + $0x3c] sm:$0xf]
    %v195 = vld [vmem:[%s4] sm:$0x1]
    %v197 = vlaneseq
    %v198 = vshrl.u32 %v197, 7
    %v199 = vsub.s32 0, %v198
    %v200 = vrot.slane %v195, %v199
    %v218 = vunpack.c.l.b16 %v179
    %v219 = vunpack.c.l.b16 %v180
    %v220 = vunpack.c.l.b16 %v181
    %v221 = vunpack.c.l.b16 %v182
    %v222 = vunpack.c.l.b16 %v183
    %v223 = vunpack.c.l.b16 %v184
    %v224 = vunpack.c.l.b16 %v185
    %v225 = vunpack.c.l.b16 %v186
    %v226 = vunpack.c.l.b16 %v187
    %v227 = vunpack.c.l.b16 %v188
    %v228 = vunpack.c.l.b16 %v189
    %v229 = vunpack.c.l.b16 %v190
    %v230 = vunpack.c.l.b16 %v191
    %v231 = vunpack.c.l.b16 %v192
    %v232 = vunpack.c.l.b16 %v193
    %v233 = vunpack.c.l.b16 %v194
    %v234 = vpack.c.b16 %v219, %v218
    %v235 = vpack.c.b16 %v221, %v220
    %v236 = vpack.c.b16 %v223, %v222
    %v237 = vpack.c.b16 %v225, %v224
    %v238 = vpack.c.b16 %v227, %v226
    %v239 = vpack.c.b16 %v229, %v228
    %v240 = vpack.c.b16 %v231, %v230
    %v241 = vpack.c.b16 %v233, %v232
    %250 = vmatprep.subr.bf16.mxu0 0
    %251 = vmatpush1.bf16.msra.mxu0 %v234
    %252 = vmatprep.subr.bf16.mxu0 0
    %253 = vmatpush1.bf16.msra.mxu0 %v235
    %254 = vmatprep.subr.bf16.mxu0 0
    %255 = vmatpush1.bf16.msra.mxu0 %v236
    %256 = vmatprep.subr.bf16.mxu0 0
    %257 = vmatpush1.bf16.msra.mxu0 %v237
    %258 = vmatprep.subr.bf16.mxu0 0
    %259 = vmatpush1.bf16.msra.mxu0 %v238
    %260 = vmatprep.subr.bf16.mxu0 0
    %261 = vmatpush1.bf16.msra.mxu0 %v239
    %262 = vmatprep.subr.bf16.mxu0 0
    %263 = vmatpush1.bf16.msra.mxu0 %v240
    %264 = vmatprep.subr.bf16.mxu0 0
    %265 = vmatpush1.bf16.msra.mxu0 %v241
    %266 = vmatprep.subr.bf16.mxu0 0
    %267 = vmatpush1.bf16.msra.mxu0 0
    %268 = vmatprep.subr.bf16.mxu0 0
    %269 = vmatpush1.bf16.msra.mxu0 0
    %270 = vmatprep.subr.bf16.mxu0 0
    %271 = vmatpush1.bf16.msra.mxu0 0
    %272 = vmatprep.subr.bf16.mxu0 0
    %273 = vmatpush1.bf16.msra.mxu0 0
    %274 = vmatprep.subr.bf16.mxu0 0
    %275 = vmatpush1.bf16.msra.mxu0 0
    %276 = vmatprep.subr.bf16.mxu0 0
    %277 = vmatpush1.bf16.msra.mxu0 0
    %278 = vmatprep.subr.bf16.mxu0 0
    %279 = vmatpush1.bf16.msra.mxu0 0
    %280 = vmatprep.subr.bf16.mxu0 0
    %281 = vmatpush1.bf16.msra.mxu0 0
    %282 = vmatprep.mubr.bf16.mxu0 0
    %283 = vmatmul.mubr.bf16.gmra.mrb[0].mxu0 %v178
    %v284 = vpop.f32.mrb[0].mxu0
    %v285 = vadd.f32 %v200, %v284
    %v286 = vpop.f32.mrb[0].mxu0
    %v287 = vpop.f32.mrb[0].mxu0
    %v288 = vadd.f32 %v200, %v287
    %v289 = vpop.f32.mrb[0].mxu0
    %290 = vdwg.mxu0
    %v291 = vmul.f32 %v285, 0.2
    %v292 = vmul.f32 %v288, 0.2
    %v293 = vmax.f32 %v285, %v291
    %v294 = vmax.f32 %v288, %v292
    %v295 = vpack.c.bf16 %v294, %v293
    %v296 = vld [vmem:[#allocation9] sm:$0xf]
    %v297 = vld [vmem:[#allocation9 + $0x4] sm:$0xf]
    %v298 = vld [vmem:[#allocation9 + $0x8] sm:$0xf]
    %v299 = vld [vmem:[#allocation9 + $0xc] sm:$0xf]
    %v300 = vld [vmem:[#allocation9 + $0x10] sm:$0xf]
    %v301 = vld [vmem:[#allocation9 + $0x14] sm:$0xf]
    %v302 = vld [vmem:[#allocation9 + $0x18] sm:$0xf]
    %v303 = vld [vmem:[#allocation9 + $0x1c] sm:$0xf]
    %v304 = vld [vmem:[#allocation9 + $0x20] sm:$0xf]
    %v305 = vld [vmem:[#allocation9 + $0x24] sm:$0xf]
    %v306 = vld [vmem:[#allocation9 + $0x28] sm:$0xf]
    %v307 = vld [vmem:[#allocation9 + $0x2c] sm:$0xf]
    %v308 = vld [vmem:[#allocation9 + $0x30] sm:$0xf]
    %v309 = vld [vmem:[#allocation9 + $0x34] sm:$0xf]
    %v310 = vld [vmem:[#allocation9 + $0x38] sm:$0xf]
    %v311 = vld [vmem:[#allocation9 + $0x3c] sm:$0xf]
    %v312 = vld [vmem:[%s6] sm:$0x1]
    %v314 = vlaneseq
    %v315 = vshrl.u32 %v314, 7
    %v316 = vsub.s32 0, %v315
    %v317 = vrot.slane %v312, %v316
    %v335 = vunpack.c.l.b16 %v296
    %v336 = vunpack.c.l.b16 %v297
    %v337 = vunpack.c.l.b16 %v298
    %v338 = vunpack.c.l.b16 %v299
    %v339 = vunpack.c.l.b16 %v300
    %v340 = vunpack.c.l.b16 %v301
    %v341 = vunpack.c.l.b16 %v302
    %v342 = vunpack.c.l.b16 %v303
    %v343 = vunpack.c.l.b16 %v304
    %v344 = vunpack.c.l.b16 %v305
    %v345 = vunpack.c.l.b16 %v306
    %v346 = vunpack.c.l.b16 %v307
    %v347 = vunpack.c.l.b16 %v308
    %v348 = vunpack.c.l.b16 %v309
    %v349 = vunpack.c.l.b16 %v310
    %v350 = vunpack.c.l.b16 %v311
    %v351 = vpack.c.b16 %v336, %v335
    %v352 = vpack.c.b16 %v338, %v337
    %v353 = vpack.c.b16 %v340, %v339
    %v354 = vpack.c.b16 %v342, %v341
    %v355 = vpack.c.b16 %v344, %v343
    %v356 = vpack.c.b16 %v346, %v345
    %v357 = vpack.c.b16 %v348, %v347
    %v358 = vpack.c.b16 %v350, %v349
    %367 = vmatprep.subr.bf16.mxu0 0
    %368 = vmatpush1.bf16.msra.mxu0 %v351
    %369 = vmatprep.subr.bf16.mxu0 0
    %370 = vmatpush1.bf16.msra.mxu0 %v352
    %371 = vmatprep.subr.bf16.mxu0 0
    %372 = vmatpush1.bf16.msra.mxu0 %v353
    %373 = vmatprep.subr.bf16.mxu0 0
    %374 = vmatpush1.bf16.msra.mxu0 %v354
    %375 = vmatprep.subr.bf16.mxu0 0
    %376 = vmatpush1.bf16.msra.mxu0 %v355
    %377 = vmatprep.subr.bf16.mxu0 0
    %378 = vmatpush1.bf16.msra.mxu0 %v356
    %379 = vmatprep.subr.bf16.mxu0 0
    %380 = vmatpush1.bf16.msra.mxu0 %v357
    %381 = vmatprep.subr.bf16.mxu0 0
    %382 = vmatpush1.bf16.msra.mxu0 %v358
    %383 = vmatprep.subr.bf16.mxu0 0
    %384 = vmatpush1.bf16.msra.mxu0 0
    %385 = vmatprep.subr.bf16.mxu0 0
    %386 = vmatpush1.bf16.msra.mxu0 0
    %387 = vmatprep.subr.bf16.mxu0 0
    %388 = vmatpush1.bf16.msra.mxu0 0
    %389 = vmatprep.subr.bf16.mxu0 0
    %390 = vmatpush1.bf16.msra.mxu0 0
    %391 = vmatprep.subr.bf16.mxu0 0
    %392 = vmatpush1.bf16.msra.mxu0 0
    %393 = vmatprep.subr.bf16.mxu0 0
    %394 = vmatpush1.bf16.msra.mxu0 0
    %395 = vmatprep.subr.bf16.mxu0 0
    %396 = vmatpush1.bf16.msra.mxu0 0
    %397 = vmatprep.subr.bf16.mxu0 0
    %398 = vmatpush1.bf16.msra.mxu0 0
    %399 = vmatprep.mubr.bf16.mxu0 0
    %400 = vmatmul.mubr.bf16.gmra.mrb[0].mxu0 %v295
    %v401 = vpop.f32.mrb[0].mxu0
    %v402 = vadd.f32 %v317, %v401
    %v403 = vpop.f32.mrb[0].mxu0
    %v404 = vpop.f32.mrb[0].mxu0
    %v405 = vadd.f32 %v317, %v404
    %v406 = vpop.f32.mrb[0].mxu0
    %407 = vdwg.mxu0
    %v408 = vmul.f32 %v402, 0.2
    %v409 = vmul.f32 %v405, 0.2
    %v410 = vmax.f32 %v402, %v408
    %v411 = vmax.f32 %v405, %v409
    %v412 = vpack.c.bf16 %v411, %v410
    %v413 = vld [vmem:[%s7] sm:$0x1]
    %v414 = vld [vmem:[#allocation2] sm:$0x1]
    %416 = vset.pattern.permute.xlu0 0
    %417 = vperm.xlu0 %416, %v414
    %v418 = vpop.permute.xlu0 %417
    %v420 = vlaneseq
    %v421 = vshrl.u32 %v420, 7
    %v422 = vsub.s32 0, %v421
    %v423 = vrot.slane %v418, %v422
    %424 = vmatprep.subr.bf16.mxu0 0
    %425 = vmatpush1.bf16.xpose.msra.mxu0 %v412
    %426 = vmatprep.subr.bf16.mxu0 0
    %427 = vmatpush1.bf16.xpose.msra.mxu0 0
    %428 = vmatprep.subr.bf16.mxu0 0
    %429 = vmatpush1.bf16.xpose.msra.mxu0 0
    %430 = vmatprep.subr.bf16.mxu0 0
    %431 = vmatpush1.bf16.xpose.msra.mxu0 0
    %432 = vmatprep.subr.bf16.mxu0 0
    %433 = vmatpush1.bf16.xpose.msra.mxu0 0
    %434 = vmatprep.subr.bf16.mxu0 0
    %435 = vmatpush1.bf16.xpose.msra.mxu0 0
    %436 = vmatprep.subr.bf16.mxu0 0
    %437 = vmatpush1.bf16.xpose.msra.mxu0 0
    %438 = vmatprep.subr.bf16.mxu0 0
    %439 = vmatpush1.bf16.xpose.msra.mxu0 0
    %440 = vmatprep.subr.bf16.mxu0 0
    %441 = vmatpush1.bf16.xpose.msra.mxu0 0
    %442 = vmatprep.subr.bf16.mxu0 0
    %443 = vmatpush1.bf16.xpose.msra.mxu0 0
    %444 = vmatprep.subr.bf16.mxu0 0
    %445 = vmatpush1.bf16.xpose.msra.mxu0 0
    %446 = vmatprep.subr.bf16.mxu0 0
    %447 = vmatpush1.bf16.xpose.msra.mxu0 0
    %448 = vmatprep.subr.bf16.mxu0 0
    %449 = vmatpush1.bf16.xpose.msra.mxu0 0
    %450 = vmatprep.subr.bf16.mxu0 0
    %451 = vmatpush1.bf16.xpose.msra.mxu0 0
    %452 = vmatprep.subr.bf16.mxu0 0
    %453 = vmatpush1.bf16.xpose.msra.mxu0 0
    %454 = vmatprep.subr.bf16.mxu0 0
    %455 = vmatpush1.bf16.xpose.msra.mxu0 0
    %456 = vmatprep.mubr.bf16.mxu0 0
    %457 = vmatmul.mubr.bf16.gmra.mrb[0].mxu0 %v413
    %v458 = vpop.f32.mrb[0].mxu0
    %v459 = vadd.f32 %v423, %v458
    %v460 = vpop.f32.mrb[0].mxu0
    %v461 = vpop.f32.mrb[0].mxu0
    %v462 = vpop.f32.mrb[0].mxu0
    %463 = vdwg.mxu0
    %v464 = vsub.f32 0.0, %v459
    %v465 = vmul.f32 %v464, 1.442695
    %v466 = vpow.pop %v465
    %v467 = vadd.f32 %v466, 1.0
    %v468 = vrcp.pop %v467
    %vm469 = vcmask 122880
    %470 = vst.msk [vmem:[#allocation11] sm:$0x1] %vm469, %v468
    // Predicated region
    $region54: #{tpu_custom_call.1} parent=1 // pred_check
      _
    $region55: #{tpu_custom_call.1} parent=1 // pred_check_branch
      %472 = sbr.rel (0) target = $region57
    $region56: #{tpu_custom_call.1} parent=1 // pred_region
      %s474 = ssub.s32 16, 16
      %475 = vsyncadd [#allocation5], %s474
      %s477 = sshll.u32 [#allocation11], 4
      %s478 = int_to_ptr.vmem [resolvable:$true] %s477
      %480 = dma.vmem_to_hbm [thread:$0]  %s478, 16, %s9, [#allocation5]
    $region57: #{tpu_custom_call.1} parent=1 // pred_fallthru
      _
    // Predicated region
    $region58: #{tpu_custom_call.1} parent=1 // pred_check
      _
    $region59: #{tpu_custom_call.1} parent=1 // pred_check_branch
      %482 = sbr.rel (0) target = $region61
    $region60: #{tpu_custom_call.1} parent=1 // pred_region
      %483 = dma.done [#allocation5], 16
    $region61: #{tpu_custom_call.1} parent=1 // pred_fallthru
      _
    %484 = vsyncpa [#allocation4], 1
    %485 = vsyncpa [#allocation7], 1
    %486 = vsyncpa [#allocation10], 1
    %487 = vsyncpa [#allocation5], 1

</llo_original>
